<compile_context>
chip_gen: v7x
topology: tpu7x:2x2x1
jax: 0.10.0
libtpu: 0.0.40
codegen_flags: <defaults>
</compile_context>

<pallas_src>
import functools

import jax
import jax.numpy as jnp
from jax.experimental import pallas as pl
from jax.experimental.pallas import tpu as pltpu


def _round_up(x, m):
    return ((x + m - 1) // m) * m


def _valuenet_kernel(x_ref, w1_ref, b1_ref, w2_ref, b2_ref, o_ref, *, chunk, n_chunks):
    # x_ref : (TB, S)   VMEM, streamed per grid step
    # w1_ref: (S, H)    VMEM-resident across the grid
    # b1_ref: (1, H)    VMEM-resident
    # w2_ref: (1, H)    VMEM-resident (fc2 weight as a lane-dense row)
    # b2_ref: (1, 1)    SMEM scalar
    # o_ref : (1, TB)   lane-dense output row for this batch tile
    w1 = w1_ref[...]
    b1 = b1_ref[...]
    w2 = w2_ref[...]
    b2 = b2_ref[0, 0]

    def compute(row_start):
        # fc1: (chunk, S) @ (S, H) on the MXU with f32 accumulation.
        xc = x_ref[pl.ds(row_start, chunk), :]
        h = jnp.dot(xc, w1, preferred_element_type=jnp.float32)
        h = jnp.maximum(h + b1, 0.0)  # ReLU on the VPU
        # fc2 (output dim 1) as a (1, H) @ (H, chunk) MXU contraction so the
        # result is a lane-dense (1, chunk) row (N axis -> lanes), avoiding a
        # (chunk, 1) column of masked partial stores.
        row = jax.lax.dot_general(
            w2, h,
            dimension_numbers=(((1,), (1,)), ((), ())),
            preferred_element_type=jnp.float32,
        ) + b2
        o_ref[:, pl.ds(row_start, chunk)] = row.astype(o_ref.dtype)

    if n_chunks == 1:
        compute(0)
    else:
        # Chunk the tile so (chunk, H) intermediates stay in vregs; unrolled
        # fori_loop keeps the live ranges bounded and visible to the scheduler.
        def body(c, carry):
            compute(pl.multiple_of(c * chunk, chunk))
            return carry

        jax.lax.fori_loop(0, n_chunks, body, 0, unroll=True)


def value_net_forward(x, w1, b1, w2, b2, *, tb=4096):
    """x: (B, S) f32, w1: (S, H), b1: (1, H), w2: (H, 1), b2: (1, 1).

    Returns (B, 1) f32, identical to relu(x @ w1 + b1) @ w2 + b2.
    """
    B, S = x.shape
    H = w1.shape[1]

    # fc2 weight passed lane-dense as a (1, H) row; b2 as an SMEM scalar.
    w2_row = jnp.reshape(w2, (1, H)).astype(jnp.float32)
    b2_s = jnp.reshape(b2, (1, 1)).astype(jnp.float32)

    # ---- batch-tile selection ------------------------------------------
    # tb is only a target; the actual TB is derived so the (8, 128) block
    # rules always hold (so a caller-supplied tb never needs validation).
    # Cap at 8192 rows: with ~1 KiB/row of double-buffered x blocks plus
    # chunked temporaries this stays far under v7x's 64 MiB VMEM.
    tb = max(256, min(int(tb), 8192))
    single_tile_max = min(tb, 2048)  # split >=2K batches so both v7x TCs get work
    if B <= single_tile_max:
        TB = B  # block == full array dims -> always a legal block shape
    else:
        n = pl.cdiv(B, tb)
        if n < 2:
            n = 2
        if n % 2:
            n += 1  # even tile count balances v7x's two TensorCores
        TB = _round_up(pl.cdiv(B, n), 256)  # multiple of 8 (sublane) and 128 (lane)
    grid = (pl.cdiv(B, TB),)

    # In-kernel chunking (keeps (chunk, H) f32 intermediates in vregs).
    CHUNK = 256
    chunk = CHUNK if (TB % CHUNK == 0 and TB > CHUNK) else TB
    n_chunks = TB // chunk

    # Scoped-VMEM budget for the chosen tiles (the default scoped limit, not
    # physical VMEM, is what the compiler enforces).  Clamp under v7x's 64 MiB.
    s_pad = _round_up(S, 128)
    h_pad = _round_up(H, 128)
    x_buf = 2 * TB * s_pad * 4                    # double-buffered, lane-padded x tiles
    out_buf = 2 * 8 * _round_up(TB, 128) * 4      # (1, TB) row padded to 8 sublanes
    w_buf = 2 * (_round_up(S, 8) * h_pad + 2 * 8 * h_pad) * 4
    tmp_buf = 4 * chunk * h_pad * 4               # h / relu temporaries headroom
    vmem_limit = max(16 << 20, int(1.5 * (x_buf + out_buf + w_buf + tmp_buf)))
    vmem_limit = min(vmem_limit, 48 << 20)

    kernel = functools.partial(_valuenet_kernel, chunk=chunk, n_chunks=n_chunks)

    out = pl.pallas_call(
        kernel,
        out_shape=jax.ShapeDtypeStruct((1, B), jnp.float32),
        grid_spec=pl.GridSpec(
            grid=grid,
            in_specs=[
                # x streams one batch tile per grid step (ragged last block OK).
                pl.BlockSpec((TB, S), lambda i: (i, 0)),
                # Weights / fc1 bias stay VMEM-resident across the grid.
                pl.BlockSpec((S, H), lambda i: (0, 0)),
                pl.BlockSpec((1, H), lambda i: (0, 0)),
                pl.BlockSpec((1, H), lambda i: (0, 0)),
                # Scalar fc2 bias lives in SMEM (no VMEM tile / DMA).
                pl.BlockSpec(memory_space=pltpu.MemorySpace.SMEM),
            ],
            out_specs=pl.BlockSpec((1, TB), lambda i: (0, i)),
        ),
        compiler_params=pltpu.CompilerParams(
            dimension_semantics=("parallel",),  # shard batch tiles across TCs on v7x
            vmem_limit_bytes=vmem_limit,
        ),
    )(x.astype(jnp.float32), w1.astype(jnp.float32), b1.astype(jnp.float32),
      w2_row, b2_s)

    # (1, B) -> (B, 1): contiguous reshape, free.
    return jnp.reshape(out, (B, 1))


def init_value_net_params(key, state_dim, hidden_dim=128):
    """Mimics torch.nn.Linear default init: U[-1/sqrt(fan_in), 1/sqrt(fan_in)]."""
    k1, k2, k3, k4 = jax.random.split(key, 4)
    bound1 = 1.0 / jnp.sqrt(jnp.float32(state_dim))
    bound2 = 1.0 / jnp.sqrt(jnp.float32(hidden_dim))
    w1 = jax.random.uniform(k1, (state_dim, hidden_dim), jnp.float32, -bound1, bound1)
    b1 = jax.random.uniform(k2, (1, hidden_dim), jnp.float32, -bound1, bound1)
    w2 = jax.random.uniform(k3, (hidden_dim, 1), jnp.float32, -bound2, bound2)
    b2 = jax.random.uniform(k4, (1, 1), jnp.float32, -bound2, bound2)
    return w1, b1, w2, b2


def _reference(x, w1, b1, w2, b2):
    return jnp.maximum(x @ w1 + b1, 0.0) @ w2 + b2


if __name__ == "__main__":
    # Small shapes consistent with the module (GridWorld state vector,
    # hidden_dim = 128 is the module default and lane-aligned).
    state_dim = 4
    hidden_dim = 128

    key = jax.random.PRNGKey(0)
    k_x, k_x2, k_p = jax.random.split(key, 3)
    w1, b1, w2, b2 = init_value_net_params(k_p, state_dim, hidden_dim)

    # Case 1: tiny batch -> single full-array block, single chunk.
    batch = 8
    x = jax.random.normal(k_x, (batch, state_dim), jnp.float32)
    out = jax.block_until_ready(value_net_forward(x, w1, b1, w2, b2))
    ref = _reference(x, w1, b1, w2, b2)
    assert out.shape == (batch, 1)
    assert jnp.allclose(out, ref, atol=1e-4, rtol=1e-4)

    # Case 2: batch not a multiple of the tile -> multi-step grid with a
    # ragged last block (no wrapper-side padding), chunked kernel body,
    # resident weights, lane-dense output row.
    batch2 = 1040
    x2 = jax.random.normal(k_x2, (batch2, state_dim), jnp.float32)
    out2 = jax.block_until_ready(value_net_forward(x2, w1, b1, w2, b2, tb=512))
    ref2 = _reference(x2, w1, b1, w2, b2)
    assert out2.shape == (batch2, 1)
    assert jnp.allclose(out2, ref2, atol=1e-4, rtol=1e-4)

    print("KERNEL_OK")
</pallas_src>

<mosaic_0001>
module attributes {stable_mosaic.version = 11 : i64} {
  func.func @_valuenet_kernel(%arg0: i32, %arg1: memref<8x4xf32, #tpu.memory_space<vmem>>, %arg2: memref<4x128xf32, #tpu.memory_space<vmem>>, %arg3: memref<1x128xf32, #tpu.memory_space<vmem>>, %arg4: memref<1x128xf32, #tpu.memory_space<vmem>>, %arg5: memref<1x1xf32, #tpu.memory_space<smem>>, %arg6: memref<1x8xf32, #tpu.memory_space<vmem>>) attributes {dimension_semantics = [#tpu.dimension_semantics<parallel>], iteration_bounds = array<i64: 1>, scalar_prefetch = 0 : i64, scratch_operands = 0 : i64, tpu.core_type = #tpu.core_type<tc>, window_params = [{transform_indices = @transform_0, window_bounds = array<i64: 8, 4>}, {pipeline_mode = #tpu.pipeline_mode<synchronous>, transform_indices = @transform_1, window_bounds = array<i64: 4, 128>}, {pipeline_mode = #tpu.pipeline_mode<synchronous>, transform_indices = @transform_2, window_bounds = array<i64: 1, 128>}, {pipeline_mode = #tpu.pipeline_mode<synchronous>, transform_indices = @transform_3, window_bounds = array<i64: 1, 128>}, {transform_indices = @transform_4, window_bounds = array<i64: 1, 1>}, {transform_indices = @transform_5, window_bounds = array<i64: 1, 8>}]} {
    %c0 = arith.constant 0 : index
    %c0_0 = arith.constant 0 : index
    %0 = vector.load %arg2[%c0, %c0_0] : memref<4x128xf32, #tpu.memory_space<vmem>>, vector<4x128xf32>
    %c0_1 = arith.constant 0 : index
    %c0_2 = arith.constant 0 : index
    %1 = vector.load %arg3[%c0_1, %c0_2] : memref<1x128xf32, #tpu.memory_space<vmem>>, vector<1x128xf32>
    %c0_3 = arith.constant 0 : index
    %c0_4 = arith.constant 0 : index
    %2 = vector.load %arg4[%c0_3, %c0_4] : memref<1x128xf32, #tpu.memory_space<vmem>>, vector<1x128xf32>
    %c0_5 = arith.constant 0 : index
    %c0_6 = arith.constant 0 : index
    %3 = memref.load %arg5[%c0_5, %c0_6] : memref<1x1xf32, #tpu.memory_space<smem>>
    %c0_7 = arith.constant 0 : index
    %c0_8 = arith.constant 0 : index
    %4 = vector.load %arg1[%c0_7, %c0_8] : memref<8x4xf32, #tpu.memory_space<vmem>>, vector<8x4xf32>
    %cst = arith.constant dense<0.000000e+00> : vector<8x128xf32>
    %5 = tpu.matmul %4, %0, %cst {dimension_numbers = #tpu.dot_dimension_numbers<[1], [0], [0], [1], [0, 0, 1, 1], [], []>} : vector<8x4xf32>, vector<4x128xf32>, vector<8x128xf32> -> vector<8x128xf32>
    %6 = vector.broadcast %1 : vector<1x128xf32> to vector<8x128xf32>
    %7 = arith.addf %5, %6 : vector<8x128xf32>
    %cst_9 = arith.constant 0.000000e+00 : f32
    %8 = vector.broadcast %cst_9 : f32 to vector<8x128xf32>
    %9 = arith.maximumf %7, %8 : vector<8x128xf32>
    %cst_10 = arith.constant dense<0.000000e+00> : vector<1x8xf32>
    %10 = tpu.matmul %2, %9, %cst_10 {dimension_numbers = #tpu.dot_dimension_numbers<[1], [1], [0], [0], [0, 0, 1, 0], [], []>} : vector<1x128xf32>, vector<8x128xf32>, vector<1x8xf32> -> vector<1x8xf32>
    %11 = vector.broadcast %3 : f32 to vector<1x8xf32>
    %12 = arith.addf %10, %11 : vector<1x8xf32>
    %c0_11 = arith.constant 0 : index
    %c0_12 = arith.constant 0 : index
    %13 = vector.load %arg6[%c0_11, %c0_12] : memref<1x8xf32, #tpu.memory_space<vmem>>, vector<1x8xf32>
    tpu.vector_store %arg6[%c0_11, %c0_12], %12 {strides = array<i32>} : memref<1x8xf32, #tpu.memory_space<vmem>>, vector<1x8xf32>,
    return
  }
  func.func @transform_0(%arg0: i32) -> (i32, i32) {
    %c0_i32 = arith.constant 0 : i32
    %c0_i32_0 = arith.constant 0 : i32
    return %arg0, %c0_i32 : i32, i32
  }
  func.func @transform_1(%arg0: i32) -> (i32, i32) {
    %c0_i32 = arith.constant 0 : i32
    %c0_i32_0 = arith.constant 0 : i32
    %c0_i32_1 = arith.constant 0 : i32
    return %c0_i32, %c0_i32_0 : i32, i32
  }
  func.func @transform_2(%arg0: i32) -> (i32, i32) {
    %c0_i32 = arith.constant 0 : i32
    %c0_i32_0 = arith.constant 0 : i32
    %c0_i32_1 = arith.constant 0 : i32
    return %c0_i32, %c0_i32_0 : i32, i32
  }
  func.func @transform_3(%arg0: i32) -> (i32, i32) {
    %c0_i32 = arith.constant 0 : i32
    %c0_i32_0 = arith.constant 0 : i32
    %c0_i32_1 = arith.constant 0 : i32
    return %c0_i32, %c0_i32_0 : i32, i32
  }
  func.func @transform_4(%arg0: i32) -> (i32, i32) {
    %c0_i32 = arith.constant 0 : i32
    %c0_i32_0 = arith.constant 0 : i32
    %c0_i32_1 = arith.constant 0 : i32
    return %c0_i32, %c0_i32_0 : i32, i32
  }
  func.func @transform_5(%arg0: i32) -> (i32, i32) {
    %c0_i32 = arith.constant 0 : i32
    %c0_i32_0 = arith.constant 0 : i32
    return %c0_i32, %arg0 : i32, i32
  }
}

</mosaic_0001>

<llo_original>
// kernel: tpu_custom_call.1
$region0: #{tpu_custom_call.1}
  #allocation0 [shape = 'u32[]', space=smem, size = 0x4, offset = 0x4, fixed_abs, tag = 'smem constant byte address 0x4 - core index']
  #allocation1 [shape = 'u32[144,128]{1,0:T(1,128)}', space=vmem, size = 0x12000, scoped, tag = 'internal scratch']
  #allocation2 [shape = 'f32[1,1]{1,0:T(1,128)S(6)}', space=smem, size = 0x200, scoped, tag = 'scoped memory for tpu_custom_call.1']
  %s0 = inlined_call_operand.vmem [shape: f32[8,4], index: 0, kind: input, shape index: {}]
  %s1 = inlined_call_operand.vmem [shape: f32[4,128], index: 1, kind: input, shape index: {}]
  %s2 = inlined_call_operand.vmem [shape: f32[1,128], index: 2, kind: input, shape index: {}]
  %s3 = inlined_call_operand.vmem [shape: f32[1,128], index: 3, kind: input, shape index: {}]
  %s4 = inlined_call_operand.<no memory space> [shape: f32[1,1], index: 4, kind: input, shape index: {}]
  %s5 = inlined_call_operand.hbm [shape: f32[1,8], index: 5, kind: output, shape index: {}]
  %s6 = sld [smem:[#allocation0]]
  $region30: #{tpu_custom_call.1} parent=0
    _
  %s8 = ssub.s32 1, %s6
  %s9 = scalar_select 0, %s8, %s6
  %10 = sst [smem:[#allocation2]] %s4
  $region1: #{tpu_custom_call.1} parent=0
    #allocation3 [shape = 'u8[512]{0}', space=vmem, size = 0x400, scoped, tag = 'output window, operand 0, single buffered']
    #allocation4 [shape = 's32[1]{0}', space=sflag, size = 0x4, scoped, tag = 'scoped memory for tpu_custom_call.1']
    %11 = vsyncpa [#allocation4], 0
    // Predicated region
    $region2: #{tpu_custom_call.1} parent=1 // pred_check
      _
    $region3: #{tpu_custom_call.1} parent=1 // pred_check_branch
      %13 = sbr.rel (0) target = $region5
    $region4: #{tpu_custom_call.1} parent=1 // pred_region
      _
    $region5: #{tpu_custom_call.1} parent=1 // pred_fallthru
      _
    // Predicated region
    $region6: #{tpu_custom_call.1} parent=1 // pred_check
      _
    $region7: #{tpu_custom_call.1} parent=1 // pred_check_branch
      %15 = sbr.rel (0) target = $region9
    $region8: #{tpu_custom_call.1} parent=1 // pred_region
      _
    $region9: #{tpu_custom_call.1} parent=1 // pred_fallthru
      _
    // Predicated region
    $region10: #{tpu_custom_call.1} parent=1 // pred_check
      _
    $region11: #{tpu_custom_call.1} parent=1 // pred_check_branch
      %17 = sbr.rel (0) target = $region13
    $region12: #{tpu_custom_call.1} parent=1 // pred_region
      _
    $region13: #{tpu_custom_call.1} parent=1 // pred_fallthru
      _
    // Predicated region
    $region14: #{tpu_custom_call.1} parent=1 // pred_check
      _
    $region15: #{tpu_custom_call.1} parent=1 // pred_check_branch
      %19 = sbr.rel (0) target = $region17
    $region16: #{tpu_custom_call.1} parent=1 // pred_region
      _
    $region17: #{tpu_custom_call.1} parent=1 // pred_fallthru
      _
    // Predicated region
    $region18: #{tpu_custom_call.1} parent=1 // pred_check
      _
    $region19: #{tpu_custom_call.1} parent=1 // pred_check_branch
      %21 = sbr.rel (0) target = $region21
    $region20: #{tpu_custom_call.1} parent=1 // pred_region
      _
    $region21: #{tpu_custom_call.1} parent=1 // pred_fallthru
      _
    %v22 = vld [vmem:[%s1] sm:$0xf]
    %v23 = vld [vmem:[%s2] sm:$0x1]
    %v24 = vld [vmem:[%s3] sm:$0x1]
    %s25 = sld [smem:[#allocation2]]
    %v26 = vld [vmem:[%s0] sm:$0xff]
    %v28 = vlaneseq
    %v29 = vshrl.u32 %v28, 7
    %v30 = vsub.s32 0, %v29
    %v31 = vrot.slane %v23, %v30
    %vm33 = vcmask 31744
    %v35 = vsel %vm33, %v26, 0
    %vm37 = vcmask 1043456
    %v39 = vsel %vm37, %v22, 0
    %41 = vmatprep.subr.mxu0 0.0
    %42 = vmatpush1.msra.mxu0 %v39
    %43 = vmatprep.subr.mxu0 0.0
    %44 = vmatpush1.msra.mxu0 0.0
    %45 = vmatprep.subr.mxu0 0.0
    %46 = vmatpush1.msra.mxu0 0.0
    %47 = vmatprep.subr.mxu0 0.0
    %48 = vmatpush1.msra.mxu0 0.0
    %49 = vmatprep.subr.mxu0 0.0
    %50 = vmatpush1.msra.mxu0 0.0
    %51 = vmatprep.subr.mxu0 0.0
    %52 = vmatpush1.msra.mxu0 0.0
    %53 = vmatprep.subr.mxu0 0.0
    %54 = vmatpush1.msra.mxu0 0.0
    %55 = vmatprep.subr.mxu0 0.0
    %56 = vmatpush1.msra.mxu0 0.0
    %57 = vmatprep.subr.mxu0 0.0
    %58 = vmatpush1.msra.mxu0 0.0
    %59 = vmatprep.subr.mxu0 0.0
    %60 = vmatpush1.msra.mxu0 0.0
    %61 = vmatprep.subr.mxu0 0.0
    %62 = vmatpush1.msra.mxu0 0.0
    %63 = vmatprep.subr.mxu0 0.0
    %64 = vmatpush1.msra.mxu0 0.0
    %65 = vmatprep.subr.mxu0 0.0
    %66 = vmatpush1.msra.mxu0 0.0
    %67 = vmatprep.subr.mxu0 0.0
    %68 = vmatpush1.msra.mxu0 0.0
    %69 = vmatprep.subr.mxu0 0.0
    %70 = vmatpush1.msra.mxu0 0.0
    %71 = vmatprep.subr.mxu0 0.0
    %72 = vmatpush1.msra.mxu0 0.0
    %73 = vmatprep.subr.mxu0 0.0
    %74 = vmatpush1.msra.mxu0 0.0
    %75 = vmatprep.subr.mxu0 0.0
    %76 = vmatpush1.msra.mxu0 0.0
    %77 = vmatprep.subr.mxu0 0.0
    %78 = vmatpush1.msra.mxu0 0.0
    %79 = vmatprep.subr.mxu0 0.0
    %80 = vmatpush1.msra.mxu0 0.0
    %81 = vmatprep.subr.mxu0 0.0
    %82 = vmatpush1.msra.mxu0 0.0
    %83 = vmatprep.subr.mxu0 0.0
    %84 = vmatpush1.msra.mxu0 0.0
    %85 = vmatprep.subr.mxu0 0.0
    %86 = vmatpush1.msra.mxu0 0.0
    %87 = vmatprep.subr.mxu0 0.0
    %88 = vmatpush1.msra.mxu0 0.0
    %89 = vmatprep.subr.mxu0 0.0
    %90 = vmatpush1.msra.mxu0 0.0
    %91 = vmatprep.subr.mxu0 0.0
    %92 = vmatpush1.msra.mxu0 0.0
    %93 = vmatprep.subr.mxu0 0.0
    %94 = vmatpush1.msra.mxu0 0.0
    %95 = vmatprep.subr.mxu0 0.0
    %96 = vmatpush1.msra.mxu0 0.0
    %97 = vmatprep.subr.mxu0 0.0
    %98 = vmatpush1.msra.mxu0 0.0
    %99 = vmatprep.subr.mxu0 0.0
    %100 = vmatpush1.msra.mxu0 0.0
    %101 = vmatprep.subr.mxu0 0.0
    %102 = vmatpush1.msra.mxu0 0.0
    %103 = vmatprep.subr.mxu0 0.0
    %104 = vmatpush1.msra.mxu0 0.0
    %105 = vmatprep.mubr.f32.mxu0 0.0
    %106 = vmatmul.mubr.f32.gmra.mrb[0].mxu0 %v35
    %v107 = vpop.f32.mrb[0].mxu0
    %v108 = vadd.f32 %v31, %v107
    %v109 = vpop.f32.mrb[0].mxu0
    %110 = vdwg.mxu0
    %v111 = vmax.f32 %v108, 0.0
    %v112 = vstv %s25
    %113 = vmatprep.subr.mxu0 0.0
    %114 = vmatpush1.xpose.msra.mxu0 %v111
    %115 = vmatprep.subr.mxu0 0.0
    %116 = vmatpush1.xpose.msra.mxu0 0.0
    %117 = vmatprep.subr.mxu0 0.0
    %118 = vmatpush1.xpose.msra.mxu0 0.0
    %119 = vmatprep.subr.mxu0 0.0
    %120 = vmatpush1.xpose.msra.mxu0 0.0
    %121 = vmatprep.subr.mxu0 0.0
    %122 = vmatpush1.xpose.msra.mxu0 0.0
    %123 = vmatprep.subr.mxu0 0.0
    %124 = vmatpush1.xpose.msra.mxu0 0.0
    %125 = vmatprep.subr.mxu0 0.0
    %126 = vmatpush1.xpose.msra.mxu0 0.0
    %127 = vmatprep.subr.mxu0 0.0
    %128 = vmatpush1.xpose.msra.mxu0 0.0
    %129 = vmatprep.subr.mxu0 0.0
    %130 = vmatpush1.xpose.msra.mxu0 0.0
    %131 = vmatprep.subr.mxu0 0.0
    %132 = vmatpush1.xpose.msra.mxu0 0.0
    %133 = vmatprep.subr.mxu0 0.0
    %134 = vmatpush1.xpose.msra.mxu0 0.0
    %135 = vmatprep.subr.mxu0 0.0
    %136 = vmatpush1.xpose.msra.mxu0 0.0
    %137 = vmatprep.subr.mxu0 0.0
    %138 = vmatpush1.xpose.msra.mxu0 0.0
    %139 = vmatprep.subr.mxu0 0.0
    %140 = vmatpush1.xpose.msra.mxu0 0.0
    %141 = vmatprep.subr.mxu0 0.0
    %142 = vmatpush1.xpose.msra.mxu0 0.0
    %143 = vmatprep.subr.mxu0 0.0
    %144 = vmatpush1.xpose.msra.mxu0 0.0
    %145 = vmatprep.subr.mxu0 0.0
    %146 = vmatpush1.xpose.msra.mxu0 0.0
    %147 = vmatprep.subr.mxu0 0.0
    %148 = vmatpush1.xpose.msra.mxu0 0.0
    %149 = vmatprep.subr.mxu0 0.0
    %150 = vmatpush1.xpose.msra.mxu0 0.0
    %151 = vmatprep.subr.mxu0 0.0
    %152 = vmatpush1.xpose.msra.mxu0 0.0
    %153 = vmatprep.subr.mxu0 0.0
    %154 = vmatpush1.xpose.msra.mxu0 0.0
    %155 = vmatprep.subr.mxu0 0.0
    %156 = vmatpush1.xpose.msra.mxu0 0.0
    %157 = vmatprep.subr.mxu0 0.0
    %158 = vmatpush1.xpose.msra.mxu0 0.0
    %159 = vmatprep.subr.mxu0 0.0
    %160 = vmatpush1.xpose.msra.mxu0 0.0
    %161 = vmatprep.subr.mxu0 0.0
    %162 = vmatpush1.xpose.msra.mxu0 0.0
    %163 = vmatprep.subr.mxu0 0.0
    %164 = vmatpush1.xpose.msra.mxu0 0.0
    %165 = vmatprep.subr.mxu0 0.0
    %166 = vmatpush1.xpose.msra.mxu0 0.0
    %167 = vmatprep.subr.mxu0 0.0
    %168 = vmatpush1.xpose.msra.mxu0 0.0
    %169 = vmatprep.subr.mxu0 0.0
    %170 = vmatpush1.xpose.msra.mxu0 0.0
    %171 = vmatprep.subr.mxu0 0.0
    %172 = vmatpush1.xpose.msra.mxu0 0.0
    %173 = vmatprep.subr.mxu0 0.0
    %174 = vmatpush1.xpose.msra.mxu0 0.0
    %175 = vmatprep.subr.mxu0 0.0
    %176 = vmatpush1.xpose.msra.mxu0 0.0
    %177 = vmatprep.mubr.f32.mxu0 0.0
    %178 = vmatmul.mubr.f32.gmra.mrb[0].mxu0 %v24
    %v179 = vpop.f32.mrb[0].mxu0
    %v180 = vadd.f32 %v112, %v179
    %v181 = vpop.f32.mrb[0].mxu0
    %182 = vdwg.mxu0
    %vm183 = vcmask 57344
    %184 = vst.msk [vmem:[#allocation3] sm:$0x1] %vm183, %v180
    // Predicated region
    $region22: #{tpu_custom_call.1} parent=1 // pred_check
      _
    $region23: #{tpu_custom_call.1} parent=1 // pred_check_branch
      %186 = sbr.rel (0) target = $region25
    $region24: #{tpu_custom_call.1} parent=1 // pred_region
      %s188 = ssub.s32 16, 16
      %189 = vsyncadd [#allocation4], %s188
      %s191 = sshll.u32 [#allocation3], 4
      %s192 = int_to_ptr.vmem [resolvable:$true] %s191
      %194 = dma.vmem_to_hbm [thread:$0]  %s192, 16, %s5, [#allocation4]
    $region25: #{tpu_custom_call.1} parent=1 // pred_fallthru
      _
    // Predicated region
    $region26: #{tpu_custom_call.1} parent=1 // pred_check
      _
    $region27: #{tpu_custom_call.1} parent=1 // pred_check_branch
      %196 = sbr.rel (0) target = $region29
    $region28: #{tpu_custom_call.1} parent=1 // pred_region
      %197 = dma.done [#allocation4], 16
    $region29: #{tpu_custom_call.1} parent=1 // pred_fallthru
      _
    %198 = vsyncpa [#allocation4], 1

</llo_original>
